<compile_context>
chip_gen: v7x
topology: tpu7x:2x2x1
jax: 0.10.0
libtpu: 0.0.40
codegen_flags: <defaults>
</compile_context>

<pallas_src>
import jax
import jax.numpy as jnp
from jax.experimental import pallas as pl
from jax.experimental.pallas import tpu as pltpu


def _round_up(x, m):
    return ((x + m - 1) // m) * m


def _tpu_generation():
    """Best-effort TPU generation sniff: 'v5' / 'v6' / 'v7' / None."""
    try:
        kind = jax.devices()[0].device_kind.lower()
    except Exception:
        return None
    for gen, tags in (("v7", ("v7", "tpu7")),
                      ("v6", ("v6", "tpu6")),
                      ("v5", ("v5", "tpu5"))):
        if any(t in kind for t in tags):
            return gen
    return None


def _tile_defaults():
    """(gen, tm, tn, vmem_limit_bytes) per TPU generation (perf-review table)."""
    gen = _tpu_generation()
    if gen == "v5":
        # 4x128x128 MXU, ~820 GB/s HBM: tm~256 makes the W2 stream compute-bound.
        return gen, 256, 512, 96 * 1024 * 1024
    if gen == "v6":
        # 918 TF/s vs ~1.4 TB/s HBM: memory-bound on W2 -> maximize tm, big DMAs.
        return gen, 512, 1024, 96 * 1024 * 1024
    if gen == "v7":
        # Only 64 MiB VMEM per TensorCore: stay well under; 2 TCs share row axis.
        return gen, 256, 512, 48 * 1024 * 1024
    # Unknown generation: conservative budget.
    return gen, 256, 512, 48 * 1024 * 1024


def _decoder_mlp_kernel(x_ref, w1_ref, b1_ref, w2_ref, b2_ref, o_ref, h_ref):
    # Grid: (row_tiles i, vocab_tiles j); j is innermost and sequential.
    j = pl.program_id(1)

    # First matmul: computed ONCE per row tile, cached as bf16 in VMEM scratch.
    @pl.when(j == 0)
    def _():
        h = jnp.dot(x_ref[...], w1_ref[...], preferred_element_type=jnp.float32)
        h_ref[...] = (h + b1_ref[...]).astype(h_ref.dtype)   # f32 bias, one cast

    # Second matmul against the streamed (Hp, tn) W2 tile; f32 accumulation.
    out = jnp.dot(h_ref[...], w2_ref[...], preferred_element_type=jnp.float32)
    o_ref[...] = (out + b2_ref[...]).astype(o_ref.dtype)      # f32 epilogue


def decoder_mlp_pallas(x, w1p, b1p, w2p, b2p, *, tm=None, tn=None,
                       w2_buffers=2, out_dtype=jnp.float32):
    """Fused (x @ W1 + b1) @ W2 + b2.

    x:   (N, E)    float (rows = flattened batch*time; N need NOT be padded)
    w1p: (E, Hp)   bf16  (Hp multiple of 128, zero-padded)
    b1p: (1, Hp)   f32
    w2p: (Hp, Vp)  bf16  (Vp multiple of 128, zero-padded)
    b2p: (1, Vp)   f32
    returns (N, Vp) out_dtype
    """
    N, E = x.shape
    Hp = w1p.shape[1]
    Vp = w2p.shape[1]

    gen, tm_def, tn_def, vmem_cap = _tile_defaults()

    if tn is None:
        tn = min(tn_def, Vp)
        while Vp % tn != 0:        # Vp is a multiple of 128 so tn=128 always works
            tn -= 128
    if tm is None:
        tm = tm_def
    tm = max(16, min(tm, _round_up(N, 16)))

    # v7x: the "parallel" row axis is what shards across the 2 TensorCores;
    # keep at least 2 row tiles when there is enough work to split.
    if gen == "v7" and pl.cdiv(N, tm) < 2 and N > 16:
        tm = max(16, _round_up(pl.cdiv(N, 2), 16))

    # Shrink tm until the pipeline footprint fits the per-generation VMEM cap.
    def _footprint(tm_):
        return (2 * tm_ * E * 2            # x    (double-buffered, bf16)
                + 2 * E * Hp * 2           # W1   (resident, bf16)
                + 2 * Hp * 4               # b1   (resident, f32)
                + w2_buffers * Hp * tn * 2 # W2   stream (bf16)
                + 2 * tn * 4               # b2   tile (f32)
                + 2 * tm_ * tn * 4         # out  tile (double-buffered)
                + tm_ * Hp * 2)            # h    scratch (bf16)
    while tm > 16 and _footprint(tm) > vmem_cap:
        tm = max(16, tm // 2)

    assert tm % 16 == 0, "bf16 rows: tm must be a multiple of 16"
    assert tn % 128 == 0 and Vp % tn == 0 and Hp % 128 == 0

    grid = (pl.cdiv(N, tm), Vp // tn)   # partial last row block handled by Pallas

    out = pl.pallas_call(
        _decoder_mlp_kernel,
        out_shape=jax.ShapeDtypeStruct((N, Vp), out_dtype),
        grid=grid,
        in_specs=[
            pl.BlockSpec((tm, E), lambda i, j: (i, 0)),        # x rows (per i)
            pl.BlockSpec((E, Hp), lambda i, j: (0, 0)),        # W1 resident
            pl.BlockSpec((1, Hp), lambda i, j: (0, 0)),        # b1 resident
            pl.BlockSpec((Hp, tn), lambda i, j: (0, j),        # W2 streamed
                         pipeline_mode=pl.Buffered(w2_buffers)),
            # TODO(synk): b2 could be held fully resident as (1, Vp) and sliced
            # in-kernel with pl.ds(j*tn, tn); kept as a tiny streamed tile to
            # avoid a dynamic lane-offset load.
            pl.BlockSpec((1, tn), lambda i, j: (0, j)),        # b2 per vocab tile
        ],
        out_specs=pl.BlockSpec((tm, tn), lambda i, j: (i, j)),  # lane-dense tile
        scratch_shapes=[pltpu.VMEM((tm, Hp), w1p.dtype)],       # cached h (bf16)
        compiler_params=pltpu.CompilerParams(
            dimension_semantics=("parallel", "arbitrary"),      # j MUST be sequential
            vmem_limit_bytes=vmem_cap,
        ),
    )(x.astype(w1p.dtype), w1p, b1p, w2p, b2p)
    return out


class DecoderRNNPallas:
    """JAX/Pallas re-implementation of the PyTorch DecoderRNN forward pass.

    Note: the reference module has no recurrence / nonlinearity — it is
    Embedding -> concat -> Linear(E->H) -> Linear(H->V), reproduced faithfully.
    """

    def __init__(self, embed_size, hidden_size, vocab_size, key,
                 *, tn=None, compute_dtype=jnp.bfloat16, out_dtype=jnp.float32):
        self.embed_size = embed_size
        self.hidden_size = hidden_size
        self.vocab_size = vocab_size
        self.out_dtype = out_dtype

        _, _, tn_def, _ = _tile_defaults()
        if tn is None:
            tn = tn_def
        # Clamp tn to the (128-rounded) vocab so tiny vocabs are not over-padded.
        tn = min(tn, _round_up(vocab_size, 128))
        tn = max(128, (tn // 128) * 128)
        self.tn = tn

        k1, k2, k3, k4, k5 = jax.random.split(key, 5)
        # f32 master parameters in PyTorch layout (kept for reference checks).
        self.embed_w = jax.random.normal(k1, (vocab_size, embed_size),
                                         jnp.float32) * 0.02
        self.lin1_w = jax.random.normal(k2, (hidden_size, embed_size),
                                        jnp.float32) * 0.05     # (H, E)
        self.lin1_b = jax.random.normal(k3, (hidden_size,), jnp.float32) * 0.05
        self.lin2_w = jax.random.normal(k4, (vocab_size, hidden_size),
                                        jnp.float32) * 0.05     # (V, H)
        self.lin2_b = jax.random.normal(k5, (vocab_size,), jnp.float32) * 0.05

        # Kernel-ready weights: pre-transposed, lane-padded, bf16 — built once.
        Hp = _round_up(hidden_size, 128)
        Vp = _round_up(vocab_size, tn)
        self._Hp, self._Vp = Hp, Vp

        self.w1p = jnp.zeros((embed_size, Hp), compute_dtype).at[
            :, :hidden_size].set(self.lin1_w.T.astype(compute_dtype))
        self.b1p = jnp.zeros((1, Hp), jnp.float32).at[
            0, :hidden_size].set(self.lin1_b)
        self.w2p = jnp.zeros((Hp, Vp), compute_dtype).at[
            :hidden_size, :vocab_size].set(self.lin2_w.T.astype(compute_dtype))
        self.b2p = jnp.zeros((1, Vp), jnp.float32).at[
            0, :vocab_size].set(self.lin2_b)

    def __call__(self, features, captions):
        # features: (B, E) float32; captions: (B, T) int32
        B, E = features.shape
        T = captions.shape[1]
        # Embedding gather + time concat kept as plain XLA glue (tiny,
        # data-dependent gather — not a Pallas win at these sizes).
        embeddings = self.embed_w[captions]                                 # (B, T, E)
        seq = jnp.concatenate([features[:, None, :], embeddings], axis=1)   # (B, T+1, E)
        x = seq.reshape(B * (T + 1), E)

        out = decoder_mlp_pallas(x, self.w1p, self.b1p, self.w2p, self.b2p,
                                 tn=self.tn, out_dtype=self.out_dtype)      # (N, Vp)
        return out[:, :self.vocab_size].reshape(B, T + 1, self.vocab_size)


if __name__ == "__main__":
    B, T = 2, 8
    # Small but lane-aligned dims: H, V multiples of 128 -> no padding waste.
    embed_size, hidden_size, vocab_size = 32, 128, 384

    key = jax.random.PRNGKey(0)
    k_mod, k_feat, k_cap = jax.random.split(key, 3)

    model = DecoderRNNPallas(embed_size, hidden_size, vocab_size, k_mod)

    features = jax.random.normal(k_feat, (B, embed_size), jnp.float32)
    captions = jax.random.randint(k_cap, (B, T), 0, vocab_size, jnp.int32)

    out = model(features, captions)
    out = jax.block_until_ready(out)

    # Reference: plain f32 JAX math with identical forward semantics.
    embeddings = model.embed_w[captions]
    seq = jnp.concatenate([features[:, None, :], embeddings], axis=1)
    ref = seq @ model.lin1_w.T + model.lin1_b
    ref = ref @ model.lin2_w.T + model.lin2_b

    assert out.shape == (B, T + 1, vocab_size)
    # bf16 MXU inputs with f32 accumulation -> loose tolerance vs f32 reference.
    assert jnp.allclose(out, ref, atol=2e-2, rtol=2e-2), \
        f"max abs diff = {float(jnp.max(jnp.abs(out - ref)))}"

    print("KERNEL_OK")
</pallas_src>

<mosaic_0001>
module attributes {stable_mosaic.version = 11 : i64} {
  func.func @_decoder_mlp_kernel(%arg0: i32, %arg1: i32, %arg2: memref<32x32xbf16, #tpu.memory_space<vmem>>, %arg3: memref<32x128xbf16, #tpu.memory_space<vmem>>, %arg4: memref<1x128xf32, #tpu.memory_space<vmem>>, %arg5: memref<128x384xbf16, #tpu.memory_space<vmem>>, %arg6: memref<1x384xf32, #tpu.memory_space<vmem>>, %arg7: memref<32x384xf32, #tpu.memory_space<vmem>>, %arg8: memref<32x128xbf16, #tpu.memory_space<vmem>>) attributes {dimension_semantics = [#tpu.dimension_semantics<parallel>, #tpu.dimension_semantics<arbitrary>], iteration_bounds = array<i64: 1, 1>, scalar_prefetch = 0 : i64, scratch_operands = 1 : i64, tpu.core_type = #tpu.core_type<tc>, window_params = [{transform_indices = @transform_0, window_bounds = array<i64: 32, 32>}, {pipeline_mode = #tpu.pipeline_mode<synchronous>, transform_indices = @transform_1, window_bounds = array<i64: 32, 128>}, {pipeline_mode = #tpu.pipeline_mode<synchronous>, transform_indices = @transform_2, window_bounds = array<i64: 1, 128>}, {pipeline_mode = #tpu.pipeline_mode<double_buffered>, transform_indices = @transform_3, window_bounds = array<i64: 128, 384>}, {transform_indices = @transform_4, window_bounds = array<i64: 1, 384>}, {transform_indices = @transform_5, window_bounds = array<i64: 32, 384>}]} {
    %c0_i32 = arith.constant 0 : i32
    %0 = arith.cmpi eq, %arg1, %c0_i32 : i32
    %1 = arith.extui %0 : i1 to i32
    %c0_i32_0 = arith.constant 0 : i32
    %2 = arith.cmpi ne, %1, %c0_i32_0 : i32
    scf.if %2 {
      %c0_8 = arith.constant 0 : index
      %c0_9 = arith.constant 0 : index
      %10 = vector.load %arg2[%c0_8, %c0_9] : memref<32x32xbf16, #tpu.memory_space<vmem>>, vector<32x32xbf16>
      %c0_10 = arith.constant 0 : index
      %c0_11 = arith.constant 0 : index
      %11 = vector.load %arg3[%c0_10, %c0_11] : memref<32x128xbf16, #tpu.memory_space<vmem>>, vector<32x128xbf16>
      %cst_12 = arith.constant dense<0.000000e+00> : vector<32x128xf32>
      %12 = tpu.matmul %10, %11, %cst_12 {dimension_numbers = #tpu.dot_dimension_numbers<[1], [0], [0], [1], [0, 0, 1, 1], [], []>} : vector<32x32xbf16>, vector<32x128xbf16>, vector<32x128xf32> -> vector<32x128xf32>
      %c0_13 = arith.constant 0 : index
      %c0_14 = arith.constant 0 : index
      %13 = vector.load %arg4[%c0_13, %c0_14] : memref<1x128xf32, #tpu.memory_space<vmem>>, vector<1x128xf32>
      %14 = vector.broadcast %13 : vector<1x128xf32> to vector<32x128xf32>
      %15 = arith.addf %12, %14 : vector<32x128xf32>
      %16 = arith.truncf %15 : vector<32x128xf32> to vector<32x128xbf16>
      %c0_15 = arith.constant 0 : index
      %c0_16 = arith.constant 0 : index
      %17 = vector.load %arg8[%c0_15, %c0_16] : memref<32x128xbf16, #tpu.memory_space<vmem>>, vector<32x128xbf16>
      tpu.vector_store %arg8[%c0_15, %c0_16], %16 {strides = array<i32>} : memref<32x128xbf16, #tpu.memory_space<vmem>>, vector<32x128xbf16>,
    } else {
    }
    %c0 = arith.constant 0 : index
    %c0_1 = arith.constant 0 : index
    %3 = vector.load %arg8[%c0, %c0_1] : memref<32x128xbf16, #tpu.memory_space<vmem>>, vector<32x128xbf16>
    %c0_2 = arith.constant 0 : index
    %c0_3 = arith.constant 0 : index
    %4 = vector.load %arg5[%c0_2, %c0_3] : memref<128x384xbf16, #tpu.memory_space<vmem>>, vector<128x384xbf16>
    %cst = arith.constant dense<0.000000e+00> : vector<32x384xf32>
    %5 = tpu.matmul %3, %4, %cst {dimension_numbers = #tpu.dot_dimension_numbers<[1], [0], [0], [1], [0, 0, 1, 1], [], []>} : vector<32x128xbf16>, vector<128x384xbf16>, vector<32x384xf32> -> vector<32x384xf32>
    %c0_4 = arith.constant 0 : index
    %c0_5 = arith.constant 0 : index
    %6 = vector.load %arg6[%c0_4, %c0_5] : memref<1x384xf32, #tpu.memory_space<vmem>>, vector<1x384xf32>
    %7 = vector.broadcast %6 : vector<1x384xf32> to vector<32x384xf32>
    %8 = arith.addf %5, %7 : vector<32x384xf32>
    %c0_6 = arith.constant 0 : index
    %c0_7 = arith.constant 0 : index
    %9 = vector.load %arg7[%c0_6, %c0_7] : memref<32x384xf32, #tpu.memory_space<vmem>>, vector<32x384xf32>
    tpu.vector_store %arg7[%c0_6, %c0_7], %8 {strides = array<i32>} : memref<32x384xf32, #tpu.memory_space<vmem>>, vector<32x384xf32>,
    return
  }
  func.func @transform_0(%arg0: i32, %arg1: i32) -> (i32, i32) {
    %c0_i32 = arith.constant 0 : i32
    %c0_i32_0 = arith.constant 0 : i32
    return %arg0, %c0_i32 : i32, i32
  }
  func.func @transform_1(%arg0: i32, %arg1: i32) -> (i32, i32) {
    %c0_i32 = arith.constant 0 : i32
    %c0_i32_0 = arith.constant 0 : i32
    %c0_i32_1 = arith.constant 0 : i32
    return %c0_i32, %c0_i32_0 : i32, i32
  }
  func.func @transform_2(%arg0: i32, %arg1: i32) -> (i32, i32) {
    %c0_i32 = arith.constant 0 : i32
    %c0_i32_0 = arith.constant 0 : i32
    %c0_i32_1 = arith.constant 0 : i32
    return %c0_i32, %c0_i32_0 : i32, i32
  }
  func.func @transform_3(%arg0: i32, %arg1: i32) -> (i32, i32) {
    %c0_i32 = arith.constant 0 : i32
    %c0_i32_0 = arith.constant 0 : i32
    return %c0_i32, %arg1 : i32, i32
  }
  func.func @transform_4(%arg0: i32, %arg1: i32) -> (i32, i32) {
    %c0_i32 = arith.constant 0 : i32
    %c0_i32_0 = arith.constant 0 : i32
    return %c0_i32, %arg1 : i32, i32
  }
  func.func @transform_5(%arg0: i32, %arg1: i32) -> (i32, i32) {
    %c0_i32 = arith.constant 0 : i32
    return %arg0, %arg1 : i32, i32
  }
}

</mosaic_0001>

<llo_original>
// kernel: tpu_custom_call.1
$region0: #{tpu_custom_call.1}
  #allocation0 [shape = 'u32[]', space=smem, size = 0x4, offset = 0x4, fixed_abs, tag = 'smem constant byte address 0x4 - core index']
  #allocation1 [shape = 'u32[144,128]{1,0:T(1,128)}', space=vmem, size = 0x12000, scoped, tag = 'internal scratch']
  #allocation2 [shape = 'bf16[32,128]{1,0:T(16,128)(2,1)}', space=vmem, size = 0x2000, scoped, tag = 'scratch operand']
  %s0 = inlined_call_operand.hbm [shape: bf16[18,32], index: 0, kind: input, shape index: {}]
  %s1 = inlined_call_operand.hbm [shape: bf16[32,128], index: 1, kind: input, shape index: {}]
  %s2 = inlined_call_operand.vmem [shape: f32[1,128], index: 2, kind: input, shape index: {}]
  %s3 = inlined_call_operand.hbm [shape: bf16[128,384], index: 3, kind: input, shape index: {}]
  %s4 = inlined_call_operand.vmem [shape: f32[1,384], index: 4, kind: input, shape index: {}]
  %s5 = inlined_call_operand.hbm [shape: f32[18,384], index: 5, kind: output, shape index: {}]
  %s6 = sld [smem:[#allocation0]]
  $region46: #{tpu_custom_call.1} parent=0
    _
  %s8 = ssub.s32 1, %s6
  %s9 = scalar_select 0, %s8, %s6
  $region1: #{tpu_custom_call.1} parent=0
    #allocation3 [shape = 'u8[8192]{0}', space=vmem, size = 0x2000, scoped, tag = 'input window, operand 0, single buffered']
    #allocation4 [shape = 's32[1]{0}', space=sflag, size = 0x4, scoped, tag = 'scoped memory for tpu_custom_call.1']
    #allocation5 [shape = 's32[1]{0}', space=sflag, size = 0x4, scoped, tag = 'scoped memory for tpu_custom_call.1']
    #allocation6 [shape = 'u8[8192]{0}', space=vmem, size = 0x2000, scoped, tag = 'input window, operand 1, single buffered']
    #allocation7 [shape = 's32[1]{0}', space=sflag, size = 0x4, scoped, tag = 'scoped memory for tpu_custom_call.1']
    #allocation8 [shape = 'u8[98304]{0}', space=vmem, size = 0x18000, scoped, tag = 'input window, operand 3, single buffered']
    #allocation9 [shape = 'u8[49152]{0}', space=vmem, size = 0xc000, scoped, tag = 'output window, operand 0, single buffered']
    %10 = vsyncpa [#allocation4], 0
    %11 = vsyncpa [#allocation7], 0
    %12 = vsyncpa [#allocation5], 0
    // Predicated region
    $region2: #{tpu_custom_call.1} parent=1 // pred_check
      _
    $region3: #{tpu_custom_call.1} parent=1 // pred_check_branch
      %14 = sbr.rel (0) target = $region5
    $region4: #{tpu_custom_call.1} parent=1 // pred_region
      %s16 = ssub.s32 256, 192
      %17 = vsyncadd [#allocation4], %s16
      %s18 = sshll.u32 [#allocation3], 4
      %s19 = int_to_ptr.vmem [resolvable:$true] %s18
      %24 = dma.hbm_to_vmem [thread:$0]  %s0, 192, %s19, [#allocation4], 64, 64, 4
    $region5: #{tpu_custom_call.1} parent=1 // pred_fallthru
      _
    // Predicated region
    $region6: #{tpu_custom_call.1} parent=1 // pred_check
      _
    $region7: #{tpu_custom_call.1} parent=1 // pred_check_branch
      %26 = sbr.rel (0) target = $region9
    $region8: #{tpu_custom_call.1} parent=1 // pred_region
      %s28 = ssub.s32 256, 256
      %29 = vsyncadd [#allocation7], %s28
      %s30 = sshll.u32 [#allocation6], 4
      %s31 = int_to_ptr.vmem [resolvable:$true] %s30
      %36 = dma.hbm_to_vmem [thread:$0]  %s1, 256, %s31, [#allocation7], 64, 64, 4
    $region9: #{tpu_custom_call.1} parent=1 // pred_fallthru
      _
    // Predicated region
    $region10: #{tpu_custom_call.1} parent=1 // pred_check
      _
    $region11: #{tpu_custom_call.1} parent=1 // pred_check_branch
      %38 = sbr.rel (0) target = $region13
    $region12: #{tpu_custom_call.1} parent=1 // pred_region
      _
    $region13: #{tpu_custom_call.1} parent=1 // pred_fallthru
      _
    // Predicated region
    $region14: #{tpu_custom_call.1} parent=1 // pred_check
      _
    $region15: #{tpu_custom_call.1} parent=1 // pred_check_branch
      %40 = sbr.rel (0) target = $region17
    $region16: #{tpu_custom_call.1} parent=1 // pred_region
      %s42 = ssub.s32 3072, 3072
      %43 = vsyncadd [#allocation7], %s42
      %s44 = sshll.u32 [#allocation8], 4
      %s45 = int_to_ptr.vmem [resolvable:$true] %s44
      %50 = dma.hbm_to_vmem [thread:$0]  %s3, 3072, %s45, [#allocation7], 192, 192, 12
    $region17: #{tpu_custom_call.1} parent=1 // pred_fallthru
      _
    // Predicated region
    $region18: #{tpu_custom_call.1} parent=1 // pred_check
      _
    $region19: #{tpu_custom_call.1} parent=1 // pred_check_branch
      %52 = sbr.rel (0) target = $region21
    $region20: #{tpu_custom_call.1} parent=1 // pred_region
      _
    $region21: #{tpu_custom_call.1} parent=1 // pred_fallthru
      _
    // Predicated region
    $region22: #{tpu_custom_call.1} parent=1 // pred_check
      _
    $region23: #{tpu_custom_call.1} parent=1 // pred_check_branch
      %54 = sbr.rel (0) target = $region25
    $region24: #{tpu_custom_call.1} parent=1 // pred_region
      %55 = dma.done [#allocation4], 256
    $region25: #{tpu_custom_call.1} parent=1 // pred_fallthru
      _
    // Predicated region
    $region26: #{tpu_custom_call.1} parent=1 // pred_check
      _
    $region27: #{tpu_custom_call.1} parent=1 // pred_check_branch
      %57 = sbr.rel (0) target = $region29
    $region28: #{tpu_custom_call.1} parent=1 // pred_region
      %58 = dma.done [#allocation7], 256
    $region29: #{tpu_custom_call.1} parent=1 // pred_fallthru
      _
    // Predicated region
    $region30: #{tpu_custom_call.1} parent=1 // pred_check
      _
    $region31: #{tpu_custom_call.1} parent=1 // pred_check_branch
      %60 = sbr.rel (0) target = $region33
    $region32: #{tpu_custom_call.1} parent=1 // pred_region
      %61 = dma.done [#allocation7], 3072
    $region33: #{tpu_custom_call.1} parent=1 // pred_fallthru
      _
    %p63 = scmp.eq.s32.totalorder 0, 0
    // Predicated region
    $region34: #{tpu_custom_call.1} parent=1 // pred_check
      %p64 = pneg %p63
    $region35: #{tpu_custom_call.1} parent=1 // pred_check_branch
      %66 = sbr.rel (%p64) target = $region37
    $region36: #{tpu_custom_call.1} parent=1 // pred_region
      %v67 = vld [vmem:[#allocation3] sm:$0xf]
      %v68 = vld [vmem:[#allocation3 + $0x4] sm:$0xf]
      %v69 = vld [vmem:[#allocation3 + $0x8] sm:$0xf]
      %v70 = vld [vmem:[#allocation3 + $0xc] sm:$0xf]
      %v71 = vld [vmem:[#allocation6] sm:$0xf]
      %v72 = vld [vmem:[#allocation6 + $0x4] sm:$0xf]
      %v73 = vld [vmem:[#allocation6 + $0x8] sm:$0xf]
      %v74 = vld [vmem:[#allocation6 + $0xc] sm:$0xf]
      %v75 = vld [vmem:[%s2] sm:$0x1]
      %v77 = vlaneseq
      %v78 = vshrl.u32 %v77, 7
      %v79 = vsub.s32 0, %v78
      %v80 = vrot.slane %v75, %v79
      %v86 = vunpack.c.l.b16 %v67
      %v87 = vunpack.c.l.b16 %v68
      %v88 = vunpack.c.l.b16 %v69
      %v89 = vunpack.c.l.b16 %v70
      %v90 = vpack.c.b16 %v87, %v86
      %v91 = vpack.c.b16 %v89, %v88
      %v96 = vunpack.c.l.b16 %v71
      %v97 = vunpack.c.l.b16 %v72
      %v98 = vunpack.c.l.b16 %v73
      %v99 = vunpack.c.l.b16 %v74
      %v100 = vpack.c.b16 %v97, %v96
      %v101 = vpack.c.b16 %v99, %v98
      %vm104 = vcmask 261120
      %v106 = vsel %vm104, %v90, 0
      %v109 = vsel %vm104, %v91, 0
      %111 = vmatprep.subr.bf16.mxu0 0
      %112 = vmatpush1.bf16.msra.mxu0 %v100
      %113 = vmatprep.subr.bf16.mxu0 0
      %114 = vmatpush1.bf16.msra.mxu0 %v101
      %115 = vmatprep.subr.bf16.mxu0 0
      %116 = vmatpush1.bf16.msra.mxu0 0
      %117 = vmatprep.subr.bf16.mxu0 0
      %118 = vmatpush1.bf16.msra.mxu0 0
      %119 = vmatprep.subr.bf16.mxu0 0
      %120 = vmatpush1.bf16.msra.mxu0 0
      %121 = vmatprep.subr.bf16.mxu0 0
      %122 = vmatpush1.bf16.msra.mxu0 0
      %123 = vmatprep.subr.bf16.mxu0 0
      %124 = vmatpush1.bf16.msra.mxu0 0
      %125 = vmatprep.subr.bf16.mxu0 0
      %126 = vmatpush1.bf16.msra.mxu0 0
      %127 = vmatprep.subr.bf16.mxu0 0
      %128 = vmatpush1.bf16.msra.mxu0 0
      %129 = vmatprep.subr.bf16.mxu0 0
      %130 = vmatpush1.bf16.msra.mxu0 0
      %131 = vmatprep.subr.bf16.mxu0 0
      %132 = vmatpush1.bf16.msra.mxu0 0
      %133 = vmatprep.subr.bf16.mxu0 0
      %134 = vmatpush1.bf16.msra.mxu0 0
      %135 = vmatprep.subr.bf16.mxu0 0
      %136 = vmatpush1.bf16.msra.mxu0 0
      %137 = vmatprep.subr.bf16.mxu0 0
      %138 = vmatpush1.bf16.msra.mxu0 0
      %139 = vmatprep.subr.bf16.mxu0 0
      %140 = vmatpush1.bf16.msra.mxu0 0
      %141 = vmatprep.subr.bf16.mxu0 0
      %142 = vmatpush1.bf16.msra.mxu0 0
      %143 = vmatprep.mubr.bf16.mxu0 0
      %144 = vmatmul.mubr.bf16.gmra.mrb[0].mxu0 %v106
      %v145 = vpop.f32.mrb[0].mxu0
      %v146 = vadd.f32 %v80, %v145
      %v147 = vpop.f32.mrb[0].mxu0
      %v148 = vpop.f32.mrb[0].mxu0
      %v149 = vadd.f32 %v80, %v148
      %v150 = vpop.f32.mrb[0].mxu0
      %151 = vmatprep.mubr.bf16.mxu0 0
      %152 = vmatmul.mubr.bf16.gmra.mrb[0].mxu0 %v109
      %v153 = vpop.f32.mrb[0].mxu0
      %v154 = vadd.f32 %v80, %v153
      %v155 = vpop.f32.mrb[0].mxu0
      %v156 = vpop.f32.mrb[0].mxu0
      %v157 = vadd.f32 %v80, %v156
      %v158 = vpop.f32.mrb[0].mxu0
      %159 = vdwg.mxu0
      %v160 = vpack.c.bf16 %v149, %v146
      %v161 = vpack.c.bf16 %v157, %v154
      %162 = vst [vmem:[#allocation2] sm:$0xff] %v160
      %163 = vst [vmem:[#allocation2 + $0x8] sm:$0xff] %v161
    $region37: #{tpu_custom_call.1} parent=1 // pred_fallthru
      _
    %v164 = vld [vmem:[#allocation2] sm:$0xff]
    %v165 = vld [vmem:[#allocation2 + $0x8] sm:$0xff]
    %v166 = vld [vmem:[#allocation8] sm:$0xff]
    %v167 = vld [vmem:[#allocation8 + $0x8] sm:$0xf]
    %v168 = vld [vmem:[#allocation8 + $0xc] sm:$0xff]
    %v169 = vld [vmem:[#allocation8 + $0x14] sm:$0xf]
    %v170 = vld [vmem:[#allocation8 + $0x18] sm:$0xff]
    %v171 = vld [vmem:[#allocation8 + $0x20] sm:$0xf]
    %v172 = vld [vmem:[#allocation8 + $0x24] sm:$0xff]
    %v173 = vld [vmem:[#allocation8 + $0x2c] sm:$0xf]
    %v174 = vld [vmem:[#allocation8 + $0x30] sm:$0xff]
    %v175 = vld [vmem:[#allocation8 + $0x38] sm:$0xf]
    %v176 = vld [vmem:[#allocation8 + $0x3c] sm:$0xff]
    %v177 = vld [vmem:[#allocation8 + $0x44] sm:$0xf]
    %v178 = vld [vmem:[#allocation8 + $0x48] sm:$0xff]
    %v179 = vld [vmem:[#allocation8 + $0x50] sm:$0xf]
    %v180 = vld [vmem:[#allocation8 + $0x54] sm:$0xff]
    %v181 = vld [vmem:[#allocation8 + $0x5c] sm:$0xf]
    %v182 = vld [vmem:[#allocation8 + $0x60] sm:$0xff]
    %v183 = vld [vmem:[#allocation8 + $0x68] sm:$0xf]
    %v184 = vld [vmem:[#allocation8 + $0x6c] sm:$0xff]
    %v185 = vld [vmem:[#allocation8 + $0x74] sm:$0xf]
    %v186 = vld [vmem:[#allocation8 + $0x78] sm:$0xff]
    %v187 = vld [vmem:[#allocation8 + $0x80] sm:$0xf]
    %v188 = vld [vmem:[#allocation8 + $0x84] sm:$0xff]
    %v189 = vld [vmem:[#allocation8 + $0x8c] sm:$0xf]
    %v190 = vld [vmem:[#allocation8 + $0x90] sm:$0xff]
    %v191 = vld [vmem:[#allocation8 + $0x98] sm:$0xf]
    %v192 = vld [vmem:[#allocation8 + $0x9c] sm:$0xff]
    %v193 = vld [vmem:[#allocation8 + $0xa4] sm:$0xf]
    %v194 = vld [vmem:[#allocation8 + $0xa8] sm:$0xff]
    %v195 = vld [vmem:[#allocation8 + $0xb0] sm:$0xf]
    %v196 = vld [vmem:[#allocation8 + $0xb4] sm:$0xff]
    %v197 = vld [vmem:[#allocation8 + $0xbc] sm:$0xf]
    %v198 = vld [vmem:[%s4] sm:$0x7]
    %v200 = vlaneseq
    %v201 = vshrl.u32 %v200, 7
    %v202 = vsub.s32 0, %v201
    %v203 = vrot.slane %v198, %v202
    %v204 = vlaneseq
    %v205 = vshrl.u32 %v204, 7
    %v206 = vsub.s32 1, %v205
    %v207 = vrot.slane %v198, %v206
    %v208 = vlaneseq
    %v209 = vshrl.u32 %v208, 7
    %v210 = vsub.s32 2, %v209
    %v211 = vrot.slane %v198, %v210
    %v247 = vunpack.c.l.b16 %v166
    %v248 = vunpack.c.h.b16 %v166
    %v249 = vunpack.c.l.b16 %v167
    %v250 = vunpack.c.l.b16 %v168
    %v251 = vunpack.c.h.b16 %v168
    %v252 = vunpack.c.l.b16 %v169
    %v253 = vunpack.c.l.b16 %v170
    %v254 = vunpack.c.h.b16 %v170
    %v255 = vunpack.c.l.b16 %v171
    %v256 = vunpack.c.l.b16 %v172
    %v257 = vunpack.c.h.b16 %v172
    %v258 = vunpack.c.l.b16 %v173
    %v259 = vunpack.c.l.b16 %v174
    %v260 = vunpack.c.h.b16 %v174
    %v261 = vunpack.c.l.b16 %v175
    %v262 = vunpack.c.l.b16 %v176
    %v263 = vunpack.c.h.b16 %v176
    %v264 = vunpack.c.l.b16 %v177
    %v265 = vunpack.c.l.b16 %v178
    %v266 = vunpack.c.h.b16 %v178
    %v267 = vunpack.c.l.b16 %v179
    %v268 = vunpack.c.l.b16 %v180
    %v269 = vunpack.c.h.b16 %v180
    %v270 = vunpack.c.l.b16 %v181
    %v271 = vunpack.c.l.b16 %v182
    %v272 = vunpack.c.h.b16 %v182
    %v273 = vunpack.c.l.b16 %v183
    %v274 = vunpack.c.l.b16 %v184
    %v275 = vunpack.c.h.b16 %v184
    %v276 = vunpack.c.l.b16 %v185
    %v277 = vunpack.c.l.b16 %v186
    %v278 = vunpack.c.h.b16 %v186
    %v279 = vunpack.c.l.b16 %v187
    %v280 = vunpack.c.l.b16 %v188
    %v281 = vunpack.c.h.b16 %v188
    %v282 = vunpack.c.l.b16 %v189
    %v283 = vunpack.c.l.b16 %v190
    %v284 = vunpack.c.h.b16 %v190
    %v285 = vunpack.c.l.b16 %v191
    %v286 = vunpack.c.l.b16 %v192
    %v287 = vunpack.c.h.b16 %v192
    %v288 = vunpack.c.l.b16 %v193
    %v289 = vunpack.c.l.b16 %v194
    %v290 = vunpack.c.h.b16 %v194
    %v291 = vunpack.c.l.b16 %v195
    %v292 = vunpack.c.l.b16 %v196
    %v293 = vunpack.c.h.b16 %v196
    %v294 = vunpack.c.l.b16 %v197
    %v295 = vpack.c.b16 %v250, %v247
    %v296 = vpack.c.b16 %v251, %v248
    %v297 = vpack.c.b16 %v252, %v249
    %v298 = vpack.c.b16 %v256, %v253
    %v299 = vpack.c.b16 %v257, %v254
    %v300 = vpack.c.b16 %v258, %v255
    %v301 = vpack.c.b16 %v262, %v259
    %v302 = vpack.c.b16 %v263, %v260
    %v303 = vpack.c.b16 %v264, %v261
    %v304 = vpack.c.b16 %v268, %v265
    %v305 = vpack.c.b16 %v269, %v266
    %v306 = vpack.c.b16 %v270, %v267
    %v307 = vpack.c.b16 %v274, %v271
    %v308 = vpack.c.b16 %v275, %v272
    %v309 = vpack.c.b16 %v276, %v273
    %v310 = vpack.c.b16 %v280, %v277
    %v311 = vpack.c.b16 %v281, %v278
    %v312 = vpack.c.b16 %v282, %v279
    %v313 = vpack.c.b16 %v286, %v283
    %v314 = vpack.c.b16 %v287, %v284
    %v315 = vpack.c.b16 %v288, %v285
    %v316 = vpack.c.b16 %v292, %v289
    %v317 = vpack.c.b16 %v293, %v290
    %v318 = vpack.c.b16 %v294, %v291
    %343 = vmatprep.subr.bf16.mxu0 %v296
    %344 = vmatpush1.bf16.msra.mxu0 %v295
    %345 = vmatprep.subr.bf16.mxu0 %v299
    %346 = vmatpush1.bf16.msra.mxu0 %v298
    %347 = vmatprep.subr.bf16.mxu0 %v302
    %348 = vmatpush1.bf16.msra.mxu0 %v301
    %349 = vmatprep.subr.bf16.mxu0 %v305
    %350 = vmatpush1.bf16.msra.mxu0 %v304
    %351 = vmatprep.subr.bf16.mxu0 %v308
    %352 = vmatpush1.bf16.msra.mxu0 %v307
    %353 = vmatprep.subr.bf16.mxu0 %v311
    %354 = vmatpush1.bf16.msra.mxu0 %v310
    %355 = vmatprep.subr.bf16.mxu0 %v314
    %356 = vmatpush1.bf16.msra.mxu0 %v313
    %357 = vmatprep.subr.bf16.mxu0 %v317
    %358 = vmatpush1.bf16.msra.mxu0 %v316
    %359 = vmatprep.subr.bf16.mxu0 0
    %360 = vmatpush1.bf16.msra.mxu0 0
    %361 = vmatprep.subr.bf16.mxu0 0
    %362 = vmatpush1.bf16.msra.mxu0 0
    %363 = vmatprep.subr.bf16.mxu0 0
    %364 = vmatpush1.bf16.msra.mxu0 0
    %365 = vmatprep.subr.bf16.mxu0 0
    %366 = vmatpush1.bf16.msra.mxu0 0
    %367 = vmatprep.subr.bf16.mxu0 0
    %368 = vmatpush1.bf16.msra.mxu0 0
    %369 = vmatprep.subr.bf16.mxu0 0
    %370 = vmatpush1.bf16.msra.mxu0 0
    %371 = vmatprep.subr.bf16.mxu0 0
    %372 = vmatpush1.bf16.msra.mxu0 0
    %373 = vmatprep.subr.bf16.mxu0 0
    %374 = vmatpush1.bf16.msra.mxu0 0
    %375 = vmatprep.mubr.bf16.mxu0 0
    %376 = vmatmul.mubr.bf16.gmra.mrb[0].mxu0 %v164
    %v377 = vpop.f32.mrb[0].mxu0
    %v378 = vadd.f32 %v203, %v377
    %v379 = vpop.f32.mrb[0].mxu0
    %v380 = vadd.f32 %v207, %v379
    %v381 = vpop.f32.mrb[0].mxu0
    %v382 = vadd.f32 %v203, %v381
    %v383 = vpop.f32.mrb[0].mxu0
    %v384 = vadd.f32 %v207, %v383
    %385 = vmatprep.mubr.bf16.mxu0 0
    %386 = vmatmul.mubr.bf16.gmra.mrb[0].mxu0 %v165
    %v387 = vpop.f32.mrb[0].mxu0
    %v388 = vadd.f32 %v203, %v387
    %v389 = vpop.f32.mrb[0].mxu0
    %v390 = vadd.f32 %v207, %v389
    %v391 = vpop.f32.mrb[0].mxu0
    %v392 = vadd.f32 %v203, %v391
    %v393 = vpop.f32.mrb[0].mxu0
    %v394 = vadd.f32 %v207, %v393
    %395 = vdwg.mxu0
    %396 = vmatprep.subr.bf16.mxu0 0
    %397 = vmatpush1.bf16.msra.mxu0 %v297
    %398 = vmatprep.subr.bf16.mxu0 0
    %399 = vmatpush1.bf16.msra.mxu0 %v300
    %400 = vmatprep.subr.bf16.mxu0 0
    %401 = vmatpush1.bf16.msra.mxu0 %v303
    %402 = vmatprep.subr.bf16.mxu0 0
    %403 = vmatpush1.bf16.msra.mxu0 %v306
    %404 = vmatprep.subr.bf16.mxu0 0
    %405 = vmatpush1.bf16.msra.mxu0 %v309
    %406 = vmatprep.subr.bf16.mxu0 0
    %407 = vmatpush1.bf16.msra.mxu0 %v312
    %408 = vmatprep.subr.bf16.mxu0 0
    %409 = vmatpush1.bf16.msra.mxu0 %v315
    %410 = vmatprep.subr.bf16.mxu0 0
    %411 = vmatpush1.bf16.msra.mxu0 %v318
    %412 = vmatprep.subr.bf16.mxu0 0
    %413 = vmatpush1.bf16.msra.mxu0 0
    %414 = vmatprep.subr.bf16.mxu0 0
    %415 = vmatpush1.bf16.msra.mxu0 0
    %416 = vmatprep.subr.bf16.mxu0 0
    %417 = vmatpush1.bf16.msra.mxu0 0
    %418 = vmatprep.subr.bf16.mxu0 0
    %419 = vmatpush1.bf16.msra.mxu0 0
    %420 = vmatprep.subr.bf16.mxu0 0
    %421 = vmatpush1.bf16.msra.mxu0 0
    %422 = vmatprep.subr.bf16.mxu0 0
    %423 = vmatpush1.bf16.msra.mxu0 0
    %424 = vmatprep.subr.bf16.mxu0 0
    %425 = vmatpush1.bf16.msra.mxu0 0
    %426 = vmatprep.subr.bf16.mxu0 0
    %427 = vmatpush1.bf16.msra.mxu0 0
    %428 = vmatprep.mubr.bf16.mxu0 0
    %429 = vmatmul.mubr.bf16.gmra.mrb[0].mxu0 %v164
    %v430 = vpop.f32.mrb[0].mxu0
    %v431 = vadd.f32 %v211, %v430
    %v432 = vpop.f32.mrb[0].mxu0
    %v433 = vpop.f32.mrb[0].mxu0
    %v434 = vadd.f32 %v211, %v433
    %v435 = vpop.f32.mrb[0].mxu0
    %436 = vmatprep.mubr.bf16.mxu0 0
    %437 = vmatmul.mubr.bf16.gmra.mrb[0].mxu0 %v165
    %v438 = vpop.f32.mrb[0].mxu0
    %v439 = vadd.f32 %v211, %v438
    %v440 = vpop.f32.mrb[0].mxu0
    %v441 = vpop.f32.mrb[0].mxu0
    %v442 = vadd.f32 %v211, %v441
    %v443 = vpop.f32.mrb[0].mxu0
    %444 = vdwg.mxu0
    %445 = vst [vmem:[#allocation9] sm:$0xff] %v378
    %446 = vst [vmem:[#allocation9 + $0x8] sm:$0xff] %v380
    %447 = vst [vmem:[#allocation9 + $0x10] sm:$0xff] %v431
    %448 = vst [vmem:[#allocation9 + $0x18] sm:$0xff] %v382
    %449 = vst [vmem:[#allocation9 + $0x20] sm:$0xff] %v384
    %450 = vst [vmem:[#allocation9 + $0x28] sm:$0xff] %v434
    %451 = vst [vmem:[#allocation9 + $0x30] sm:$0xff] %v388
    %452 = vst [vmem:[#allocation9 + $0x38] sm:$0xff] %v390
    %453 = vst [vmem:[#allocation9 + $0x40] sm:$0xff] %v439
    %454 = vst [vmem:[#allocation9 + $0x48] sm:$0xff] %v392
    %455 = vst [vmem:[#allocation9 + $0x50] sm:$0xff] %v394
    %456 = vst [vmem:[#allocation9 + $0x58] sm:$0xff] %v442
    // Predicated region
    $region38: #{tpu_custom_call.1} parent=1 // pred_check
      _
    $region39: #{tpu_custom_call.1} parent=1 // pred_check_branch
      %458 = sbr.rel (0) target = $region41
    $region40: #{tpu_custom_call.1} parent=1 // pred_region
      %s460 = ssub.s32 1536, 1152
      %461 = vsyncadd [#allocation5], %s460
      %s462 = sshll.u32 [#allocation9], 4
      %s463 = int_to_ptr.vmem [resolvable:$true] %s462
      %468 = dma.vmem_to_hbm [thread:$0]  %s463, 1152, %s5, [#allocation5], 384, 384, 24
    $region41: #{tpu_custom_call.1} parent=1 // pred_fallthru
      _
    // Predicated region
    $region42: #{tpu_custom_call.1} parent=1 // pred_check
      _
    $region43: #{tpu_custom_call.1} parent=1 // pred_check_branch
      %470 = sbr.rel (0) target = $region45
    $region44: #{tpu_custom_call.1} parent=1 // pred_region
      %471 = dma.done [#allocation5], 1536
    $region45: #{tpu_custom_call.1} parent=1 // pred_fallthru
      _
    %472 = vsyncpa [#allocation4], 1
    %473 = vsyncpa [#allocation7], 1
    %474 = vsyncpa [#allocation5], 1

</llo_original>
